<compile_context>
chip_gen: v7x
topology: tpu7x:2x2x1
jax: 0.10.0
libtpu: 0.0.40
codegen_flags: <defaults>
</compile_context>

<pallas_src>
import jax
import jax.numpy as jnp
from jax import lax
from jax.experimental import pallas as pl
from jax.experimental.pallas import tpu as pltpu

_LANE = 128
_SUBLANE = 8
# Scoped-VMEM limit we request. Safe on v5e/v6e (128 MiB physical) and v7x
# (64 MiB physical); v5e's *default* scoped limit is only 16 MiB, so without
# this override the larger tiles below would not compile there.
_VMEM_LIMIT_BYTES = 32 * 1024 * 1024
# Keep the double-buffered working set under ~24 MiB (headroom for compiler
# internal scratch inside the 32 MiB scoped limit).
_VMEM_BUDGET_BYTES = 24 * 1024 * 1024
# Per-step HBM traffic sweet spot: large enough to amortize the ~0.35 us
# per-grid-step overhead, small enough to keep a multi-step pipeline alive.
_STEP_BYTES_TARGET = 2 * 1024 * 1024


def _round_up(v, m):
    return -(-v // m) * m


def _spec_preproc_kernel(x_ref, w_ref, b_ref, o_ref):
    # x_ref: (bt, tt, M)   w_ref: (C, M)   b_ref: (C, 1)   o_ref: (bt, C, tt)
    w = w_ref[...]
    b = b_ref[...]
    bt = x_ref.shape[0]
    # Small static unrolled loop over the clips packed into this block.
    for i in range(bt):
        # (C, M) x (tt, M) contracting on M -> (C, tt): frames land on the
        # lane axis, so the output block is already lane-dense NCW. The RHS is
        # fed [N, K]; any per-tile operand transpose runs on the XLU slot and
        # stays hidden under the DMA on this HBM-bound kernel (review item #8).
        y = lax.dot_general(
            w, x_ref[i],
            dimension_numbers=(((1,), (1,)), ((), ())),
            preferred_element_type=jnp.float32,
        )
        y = y + b                      # (C, 1) bias broadcasts over frames
        o_ref[i, :, :] = jnp.maximum(y, 0.0).astype(o_ref.dtype)


def spectrogram_preprocessor(x, weight, bias, *, tile_t=None, out_dtype=None):
    """x: [B, T, n_mel]; weight: [C, n_mel, 1]; bias: [C] -> [B, C, T] (PyTorch NCW).

    out_dtype: pass jnp.bfloat16 to halve the dominant output write stream if
    the downstream residual stack runs in bf16 (MXU accumulation stays f32).
    Default f32 matches the PyTorch module exactly.
    """
    B, T, M = x.shape
    C = weight.shape[0]
    w_cm = weight[:, :, 0]             # (C, M)
    b_c1 = bias.reshape(C, 1)          # (C, 1)
    out_dtype = jnp.float32 if out_dtype is None else out_dtype

    x_it = jnp.dtype(x.dtype).itemsize
    o_it = jnp.dtype(out_dtype).itemsize
    w_it = jnp.dtype(w_cm.dtype).itemsize
    m_pad = _round_up(M, _LANE)        # n_mel < 128 pads to a full 128-lane tile
    c_pad = _round_up(C, _SUBLANE)

    # Resident weight/bias footprint (constant index_map -> fetched once, but
    # BlockSpec still allocates double buffers).
    resident = 2 * (c_pad * m_pad + c_pad * _LANE) * w_it
    budget = _VMEM_BUDGET_BYTES - resident

    def step_vmem(bt, tt):
        # Double-buffered x tile (lane-padded mel axis) + output tile.
        xb = bt * _round_up(max(tt, _SUBLANE), _SUBLANE) * m_pad * x_it
        ob = bt * c_pad * _round_up(tt, _LANE) * o_it
        return 2 * (xb + ob)

    def step_hbm(bt, tt):
        return bt * tt * (M * x_it + C * o_it)

    # Frame-tile target: 2048 keeps DMA >> per-step overhead on every
    # generation, including v7x's ~3.2 TB/s HBM (review items #1/#2).
    target = 2048 if tile_t is None else max(1, int(tile_t))

    if T <= target:
        # Whole-clip blocks. Pack several clips per grid step when B > 1 so
        # each step moves ~MiB of data (review item #7). Restricted to
        # divisors of B so no block runs past the batch extent.
        b_tile = 1
        for d in range(1, min(B, 32) + 1):
            if B % d:
                continue
            if step_vmem(d, T) > budget:
                break
            b_tile = d
            if step_hbm(d, T) >= _STEP_BYTES_TARGET:
                break
        grid = (B // b_tile,)
        in_specs = [
            pl.BlockSpec((b_tile, T, M), lambda i: (i, 0, 0)),   # x clip-block
            pl.BlockSpec((C, M), lambda i: (0, 0)),              # resident weight
            pl.BlockSpec((C, 1), lambda i: (0, 0)),              # resident bias
        ]
        out_spec = pl.BlockSpec((b_tile, C, T), lambda i: (i, 0, 0))
        dim_sem = ("parallel",)
    else:
        # Long clips: tile the frame axis in multiples of 128 (lane-dense,
        # unmasked vst), sized to the VMEM budget. Grid leads with the
        # frame-tile axis so v7x megacore shards frame tiles, not the (often
        # 1-2) batch entries (review item #6).
        tt = max(_LANE, (min(target, T) // _LANE) * _LANE)
        while tt > _LANE and step_vmem(1, tt) > budget:
            tt -= _LANE
        grid = (pl.cdiv(T, tt), B)
        in_specs = [
            pl.BlockSpec((1, tt, M), lambda t, b: (b, t, 0)),    # x frame-tile
            pl.BlockSpec((C, M), lambda t, b: (0, 0)),           # resident weight
            pl.BlockSpec((C, 1), lambda t, b: (0, 0)),           # resident bias
        ]
        out_spec = pl.BlockSpec((1, C, tt), lambda t, b: (b, 0, t))
        dim_sem = ("parallel", "parallel")

    cost = pl.CostEstimate(
        flops=2 * B * T * C * M,
        transcendentals=0,
        bytes_accessed=B * T * M * x_it + B * C * T * o_it + C * M * w_it + C * w_it,
    )

    return pl.pallas_call(
        _spec_preproc_kernel,
        out_shape=jax.ShapeDtypeStruct((B, C, T), out_dtype),
        grid_spec=pltpu.PrefetchScalarGridSpec(
            num_scalar_prefetch=0,
            grid=grid,
            in_specs=in_specs,
            out_specs=out_spec,
        ),
        compiler_params=pltpu.CompilerParams(
            dimension_semantics=dim_sem,
            vmem_limit_bytes=_VMEM_LIMIT_BYTES,
        ),
        cost_estimate=cost,
    )(x, w_cm, b_c1)


def _reference(x, weight, bias):
    return jnp.maximum(
        jnp.einsum("btm,cm->bct", x, weight[:, :, 0]) + bias[None, :, None], 0.0
    )


if __name__ == "__main__":
    # Small shapes consistent with the module.
    B, T, n_mel, residual_channels = 2, 16, 32, 64

    key = jax.random.PRNGKey(0)
    kx, kw, kb, kx2 = jax.random.split(key, 4)

    x = jax.random.normal(kx, (B, T, n_mel), dtype=jnp.float32)

    # Deterministic parameter init mirroring nn.Conv1d + kaiming_normal_:
    #   weight: [C_out, C_in, 1], std = sqrt(2 / fan_in), fan_in = n_mel * 1
    #   bias:   uniform(-1/sqrt(fan_in), 1/sqrt(fan_in))
    fan_in = n_mel
    w_std = (2.0 / fan_in) ** 0.5
    weight = w_std * jax.random.normal(
        kw, (residual_channels, n_mel, 1), dtype=jnp.float32
    )
    b_bound = 1.0 / (fan_in ** 0.5)
    bias = jax.random.uniform(
        kb, (residual_channels,), dtype=jnp.float32, minval=-b_bound, maxval=b_bound
    )

    # Case 1: short clips -> batch-blocked path (multiple clips per grid step).
    y = jax.block_until_ready(spectrogram_preprocessor(x, weight, bias))
    y_ref = _reference(x, weight, bias)
    assert y.shape == (B, residual_channels, T)
    assert jnp.allclose(y, y_ref, atol=1e-5, rtol=1e-5)

    # Case 2: longer clip -> frame-tiled path with a padded (masked) tail block.
    T2 = 160
    x2 = jax.random.normal(kx2, (B, T2, n_mel), dtype=jnp.float32)
    y2 = jax.block_until_ready(
        spectrogram_preprocessor(x2, weight, bias, tile_t=128)
    )
    y2_ref = _reference(x2, weight, bias)
    assert y2.shape == (B, residual_channels, T2)
    assert jnp.allclose(y2, y2_ref, atol=1e-5, rtol=1e-5)

    print("KERNEL_OK")
</pallas_src>

<mosaic_0001>
module attributes {stable_mosaic.version = 11 : i64} {
  func.func @_spec_preproc_kernel(%arg0: i32, %arg1: memref<2x16x32xf32, #tpu.memory_space<vmem>>, %arg2: memref<64x32xf32, #tpu.memory_space<vmem>>, %arg3: memref<64x1xf32, #tpu.memory_space<vmem>>, %arg4: memref<2x64x16xf32, #tpu.memory_space<vmem>>) attributes {dimension_semantics = [#tpu.dimension_semantics<parallel>], iteration_bounds = array<i64: 1>, scalar_prefetch = 0 : i64, scratch_operands = 0 : i64, tpu.core_type = #tpu.core_type<tc>, window_params = [{transform_indices = @transform_0, window_bounds = array<i64: 2, 16, 32>}, {pipeline_mode = #tpu.pipeline_mode<synchronous>, transform_indices = @transform_1, window_bounds = array<i64: 64, 32>}, {pipeline_mode = #tpu.pipeline_mode<synchronous>, transform_indices = @transform_2, window_bounds = array<i64: 64, 1>}, {transform_indices = @transform_3, window_bounds = array<i64: 2, 64, 16>}]} {
    %c0 = arith.constant 0 : index
    %c0_0 = arith.constant 0 : index
    %0 = vector.load %arg2[%c0, %c0_0] : memref<64x32xf32, #tpu.memory_space<vmem>>, vector<64x32xf32>
    %c0_1 = arith.constant 0 : index
    %c0_2 = arith.constant 0 : index
    %1 = vector.load %arg3[%c0_1, %c0_2] : memref<64x1xf32, #tpu.memory_space<vmem>>, vector<64x1xf32>
    %c0_3 = arith.constant 0 : index
    %c0_4 = arith.constant 0 : index
    %c0_5 = arith.constant 0 : index
    %2 = vector.load %arg1[%c0_3, %c0_4, %c0_5] : memref<2x16x32xf32, #tpu.memory_space<vmem>>, vector<1x16x32xf32>
    %3 = vector.shape_cast %2 : vector<1x16x32xf32> to vector<16x32xf32>
    %cst = arith.constant dense<0.000000e+00> : vector<64x16xf32>
    %4 = tpu.matmul %0, %3, %cst {dimension_numbers = #tpu.dot_dimension_numbers<[1], [1], [0], [0], [0, 0, 1, 0], [], []>} : vector<64x32xf32>, vector<16x32xf32>, vector<64x16xf32> -> vector<64x16xf32>
    %5 = vector.broadcast %1 : vector<64x1xf32> to vector<64x16xf32>
    %6 = arith.addf %4, %5 : vector<64x16xf32>
    %cst_6 = arith.constant 0.000000e+00 : f32
    %7 = vector.broadcast %cst_6 : f32 to vector<64x16xf32>
    %8 = arith.maximumf %6, %7 : vector<64x16xf32>
    %c0_7 = arith.constant 0 : index
    %c0_8 = arith.constant 0 : index
    %c0_9 = arith.constant 0 : index
    %9 = vector.load %arg4[%c0_7, %c0_8, %c0_9] : memref<2x64x16xf32, #tpu.memory_space<vmem>>, vector<1x64x16xf32>
    %10 = vector.shape_cast %9 : vector<1x64x16xf32> to vector<64x16xf32>
    %11 = vector.shape_cast %8 : vector<64x16xf32> to vector<1x64x16xf32>
    tpu.vector_store %arg4[%c0_7, %c0_8, %c0_9], %11 {strides = array<i32>} : memref<2x64x16xf32, #tpu.memory_space<vmem>>, vector<1x64x16xf32>,
    %c1 = arith.constant 1 : index
    %c0_10 = arith.constant 0 : index
    %c0_11 = arith.constant 0 : index
    %12 = vector.load %arg1[%c1, %c0_10, %c0_11] : memref<2x16x32xf32, #tpu.memory_space<vmem>>, vector<1x16x32xf32>
    %13 = vector.shape_cast %12 : vector<1x16x32xf32> to vector<16x32xf32>
    %cst_12 = arith.constant dense<0.000000e+00> : vector<64x16xf32>
    %14 = tpu.matmul %0, %13, %cst_12 {dimension_numbers = #tpu.dot_dimension_numbers<[1], [1], [0], [0], [0, 0, 1, 0], [], []>} : vector<64x32xf32>, vector<16x32xf32>, vector<64x16xf32> -> vector<64x16xf32>
    %15 = vector.broadcast %1 : vector<64x1xf32> to vector<64x16xf32>
    %16 = arith.addf %14, %15 : vector<64x16xf32>
    %cst_13 = arith.constant 0.000000e+00 : f32
    %17 = vector.broadcast %cst_13 : f32 to vector<64x16xf32>
    %18 = arith.maximumf %16, %17 : vector<64x16xf32>
    %c1_14 = arith.constant 1 : index
    %c0_15 = arith.constant 0 : index
    %c0_16 = arith.constant 0 : index
    %19 = vector.load %arg4[%c1_14, %c0_15, %c0_16] : memref<2x64x16xf32, #tpu.memory_space<vmem>>, vector<1x64x16xf32>
    %20 = vector.shape_cast %19 : vector<1x64x16xf32> to vector<64x16xf32>
    %21 = vector.shape_cast %18 : vector<64x16xf32> to vector<1x64x16xf32>
    tpu.vector_store %arg4[%c1_14, %c0_15, %c0_16], %21 {strides = array<i32>} : memref<2x64x16xf32, #tpu.memory_space<vmem>>, vector<1x64x16xf32>,
    return
  }
  func.func @transform_0(%arg0: i32) -> (i32, i32, i32) {
    %c0_i32 = arith.constant 0 : i32
    %c0_i32_0 = arith.constant 0 : i32
    %c0_i32_1 = arith.constant 0 : i32
    return %arg0, %c0_i32, %c0_i32_0 : i32, i32, i32
  }
  func.func @transform_1(%arg0: i32) -> (i32, i32) {
    %c0_i32 = arith.constant 0 : i32
    %c0_i32_0 = arith.constant 0 : i32
    %c0_i32_1 = arith.constant 0 : i32
    return %c0_i32, %c0_i32_0 : i32, i32
  }
  func.func @transform_2(%arg0: i32) -> (i32, i32) {
    %c0_i32 = arith.constant 0 : i32
    %c0_i32_0 = arith.constant 0 : i32
    %c0_i32_1 = arith.constant 0 : i32
    return %c0_i32, %c0_i32_0 : i32, i32
  }
  func.func @transform_3(%arg0: i32) -> (i32, i32, i32) {
    %c0_i32 = arith.constant 0 : i32
    %c0_i32_0 = arith.constant 0 : i32
    %c0_i32_1 = arith.constant 0 : i32
    return %arg0, %c0_i32, %c0_i32_0 : i32, i32, i32
  }
}

</mosaic_0001>

<llo_original>
// kernel: tpu_custom_call.1
$region0: #{tpu_custom_call.1}
  #allocation0 [shape = 'u32[]', space=smem, size = 0x4, offset = 0x4, fixed_abs, tag = 'smem constant byte address 0x4 - core index']
  #allocation1 [shape = 'u32[144,128]{1,0:T(1,128)}', space=vmem, size = 0x12000, scoped, tag = 'internal scratch']
  %s0 = inlined_call_operand.vmem [shape: f32[2,16,32], index: 0, kind: input, shape index: {}]
  %s1 = inlined_call_operand.vmem [shape: f32[64,32], index: 1, kind: input, shape index: {}]
  %s2 = inlined_call_operand.vmem [shape: f32[64,1], index: 2, kind: input, shape index: {}]
  %s3 = inlined_call_operand.vmem [shape: f32[2,64,16], index: 3, kind: output, shape index: {}]
  %s4 = sld [smem:[#allocation0]]
  $region22: #{tpu_custom_call.1} parent=0
    _
  %s6 = ssub.s32 1, %s4
  %s7 = scalar_select 0, %s6, %s4
  // Predicated region
  $region2: #{tpu_custom_call.1} parent=0 // pred_check
    _
  $region3: #{tpu_custom_call.1} parent=0 // pred_check_branch
    %9 = sbr.rel (0) target = $region5
  $region4: #{tpu_custom_call.1} parent=0 // pred_region
    _
  $region5: #{tpu_custom_call.1} parent=0 // pred_fallthru
    _
  // Predicated region
  $region6: #{tpu_custom_call.1} parent=0 // pred_check
    _
  $region7: #{tpu_custom_call.1} parent=0 // pred_check_branch
    %11 = sbr.rel (0) target = $region9
  $region8: #{tpu_custom_call.1} parent=0 // pred_region
    _
  $region9: #{tpu_custom_call.1} parent=0 // pred_fallthru
    _
  // Predicated region
  $region10: #{tpu_custom_call.1} parent=0 // pred_check
    _
  $region11: #{tpu_custom_call.1} parent=0 // pred_check_branch
    %13 = sbr.rel (0) target = $region13
  $region12: #{tpu_custom_call.1} parent=0 // pred_region
    _
  $region13: #{tpu_custom_call.1} parent=0 // pred_fallthru
    _
  %v14 = vld [vmem:[%s1] sm:$0xff]
  %v15 = vld [vmem:[%s1 + $0x8] sm:$0xff]
  %v16 = vld [vmem:[%s1 + $0x10] sm:$0xff]
  %v17 = vld [vmem:[%s1 + $0x18] sm:$0xff]
  %v18 = vld [vmem:[%s1 + $0x20] sm:$0xff]
  %v19 = vld [vmem:[%s1 + $0x28] sm:$0xff]
  %v20 = vld [vmem:[%s1 + $0x30] sm:$0xff]
  %v21 = vld [vmem:[%s1 + $0x38] sm:$0xff]
  %v22 = vld [vmem:[%s2] sm:$0xff]
  %v23 = vld [vmem:[%s2 + $0x8] sm:$0xff]
  %v24 = vld [vmem:[%s2 + $0x10] sm:$0xff]
  %v25 = vld [vmem:[%s2 + $0x18] sm:$0xff]
  %v26 = vld [vmem:[%s2 + $0x20] sm:$0xff]
  %v27 = vld [vmem:[%s2 + $0x28] sm:$0xff]
  %v28 = vld [vmem:[%s2 + $0x30] sm:$0xff]
  %v29 = vld [vmem:[%s2 + $0x38] sm:$0xff]
  %v30 = vld [vmem:[%s0] sm:$0xff]
  %v31 = vld [vmem:[%s0 + $0x8] sm:$0xff]
  %33 = vset.pattern.permute.xlu0 0
  %34 = vperm.xlu0 %33, %v22
  %v35 = vpop.permute.xlu0 %34
  %38 = vset.pattern.permute.xlu0 0
  %39 = vperm.xlu0 %38, %v23
  %v40 = vpop.permute.xlu0 %39
  %43 = vset.pattern.permute.xlu0 0
  %44 = vperm.xlu0 %43, %v24
  %v45 = vpop.permute.xlu0 %44
  %48 = vset.pattern.permute.xlu0 0
  %49 = vperm.xlu0 %48, %v25
  %v50 = vpop.permute.xlu0 %49
  %53 = vset.pattern.permute.xlu0 0
  %54 = vperm.xlu0 %53, %v26
  %v55 = vpop.permute.xlu0 %54
  %58 = vset.pattern.permute.xlu0 0
  %59 = vperm.xlu0 %58, %v27
  %v60 = vpop.permute.xlu0 %59
  %63 = vset.pattern.permute.xlu0 0
  %64 = vperm.xlu0 %63, %v28
  %v65 = vpop.permute.xlu0 %64
  %68 = vset.pattern.permute.xlu0 0
  %69 = vperm.xlu0 %68, %v29
  %v70 = vpop.permute.xlu0 %69
  %vm72 = vcmask 261120
  %v74 = vsel %vm72, %v14, 0
  %v77 = vsel %vm72, %v15, 0
  %v80 = vsel %vm72, %v16, 0
  %v83 = vsel %vm72, %v17, 0
  %v86 = vsel %vm72, %v18, 0
  %v89 = vsel %vm72, %v19, 0
  %v92 = vsel %vm72, %v20, 0
  %v95 = vsel %vm72, %v21, 0
  %v98 = vsel %vm72, %v30, 0
  %v101 = vsel %vm72, %v31, 0
  %103 = vmatprep.subr.mxu0 0.0
  %104 = vmatpush1.xpose.msra.mxu0 %v98
  %105 = vmatprep.subr.mxu0 0.0
  %106 = vmatpush1.xpose.msra.mxu0 %v101
  %107 = vmatprep.subr.mxu0 0.0
  %108 = vmatpush1.xpose.msra.mxu0 0.0
  %109 = vmatprep.subr.mxu0 0.0
  %110 = vmatpush1.xpose.msra.mxu0 0.0
  %111 = vmatprep.subr.mxu0 0.0
  %112 = vmatpush1.xpose.msra.mxu0 0.0
  %113 = vmatprep.subr.mxu0 0.0
  %114 = vmatpush1.xpose.msra.mxu0 0.0
  %115 = vmatprep.subr.mxu0 0.0
  %116 = vmatpush1.xpose.msra.mxu0 0.0
  %117 = vmatprep.subr.mxu0 0.0
  %118 = vmatpush1.xpose.msra.mxu0 0.0
  %119 = vmatprep.subr.mxu0 0.0
  %120 = vmatpush1.xpose.msra.mxu0 0.0
  %121 = vmatprep.subr.mxu0 0.0
  %122 = vmatpush1.xpose.msra.mxu0 0.0
  %123 = vmatprep.subr.mxu0 0.0
  %124 = vmatpush1.xpose.msra.mxu0 0.0
  %125 = vmatprep.subr.mxu0 0.0
  %126 = vmatpush1.xpose.msra.mxu0 0.0
  %127 = vmatprep.subr.mxu0 0.0
  %128 = vmatpush1.xpose.msra.mxu0 0.0
  %129 = vmatprep.subr.mxu0 0.0
  %130 = vmatpush1.xpose.msra.mxu0 0.0
  %131 = vmatprep.subr.mxu0 0.0
  %132 = vmatpush1.xpose.msra.mxu0 0.0
  %133 = vmatprep.subr.mxu0 0.0
  %134 = vmatpush1.xpose.msra.mxu0 0.0
  %135 = vmatprep.subr.mxu0 0.0
  %136 = vmatpush1.xpose.msra.mxu0 0.0
  %137 = vmatprep.subr.mxu0 0.0
  %138 = vmatpush1.xpose.msra.mxu0 0.0
  %139 = vmatprep.subr.mxu0 0.0
  %140 = vmatpush1.xpose.msra.mxu0 0.0
  %141 = vmatprep.subr.mxu0 0.0
  %142 = vmatpush1.xpose.msra.mxu0 0.0
  %143 = vmatprep.subr.mxu0 0.0
  %144 = vmatpush1.xpose.msra.mxu0 0.0
  %145 = vmatprep.subr.mxu0 0.0
  %146 = vmatpush1.xpose.msra.mxu0 0.0
  %147 = vmatprep.subr.mxu0 0.0
  %148 = vmatpush1.xpose.msra.mxu0 0.0
  %149 = vmatprep.subr.mxu0 0.0
  %150 = vmatpush1.xpose.msra.mxu0 0.0
  %151 = vmatprep.subr.mxu0 0.0
  %152 = vmatpush1.xpose.msra.mxu0 0.0
  %153 = vmatprep.subr.mxu0 0.0
  %154 = vmatpush1.xpose.msra.mxu0 0.0
  %155 = vmatprep.subr.mxu0 0.0
  %156 = vmatpush1.xpose.msra.mxu0 0.0
  %157 = vmatprep.subr.mxu0 0.0
  %158 = vmatpush1.xpose.msra.mxu0 0.0
  %159 = vmatprep.subr.mxu0 0.0
  %160 = vmatpush1.xpose.msra.mxu0 0.0
  %161 = vmatprep.subr.mxu0 0.0
  %162 = vmatpush1.xpose.msra.mxu0 0.0
  %163 = vmatprep.subr.mxu0 0.0
  %164 = vmatpush1.xpose.msra.mxu0 0.0
  %165 = vmatprep.subr.mxu0 0.0
  %166 = vmatpush1.xpose.msra.mxu0 0.0
  %167 = vmatprep.mubr.f32.mxu0 0.0
  %168 = vmatmul.mubr.f32.gmra.mrb[0].mxu0 %v74
  %v169 = vpop.f32.mrb[0].mxu0
  %v170 = vadd.f32 %v35, %v169
  %v171 = vpop.f32.mrb[0].mxu0
  %172 = vmatprep.mubr.f32.mxu0 0.0
  %173 = vmatmul.mubr.f32.gmra.mrb[0].mxu0 %v77
  %v174 = vpop.f32.mrb[0].mxu0
  %v175 = vadd.f32 %v40, %v174
  %v176 = vpop.f32.mrb[0].mxu0
  %177 = vmatprep.mubr.f32.mxu0 0.0
  %178 = vmatmul.mubr.f32.gmra.mrb[0].mxu0 %v80
  %v179 = vpop.f32.mrb[0].mxu0
  %v180 = vadd.f32 %v45, %v179
  %v181 = vpop.f32.mrb[0].mxu0
  %182 = vmatprep.mubr.f32.mxu0 0.0
  %183 = vmatmul.mubr.f32.gmra.mrb[0].mxu0 %v83
  %v184 = vpop.f32.mrb[0].mxu0
  %v185 = vadd.f32 %v50, %v184
  %v186 = vpop.f32.mrb[0].mxu0
  %187 = vmatprep.mubr.f32.mxu0 0.0
  %188 = vmatmul.mubr.f32.gmra.mrb[0].mxu0 %v86
  %v189 = vpop.f32.mrb[0].mxu0
  %v190 = vadd.f32 %v55, %v189
  %v191 = vpop.f32.mrb[0].mxu0
  %192 = vmatprep.mubr.f32.mxu0 0.0
  %193 = vmatmul.mubr.f32.gmra.mrb[0].mxu0 %v89
  %v194 = vpop.f32.mrb[0].mxu0
  %v195 = vadd.f32 %v60, %v194
  %v196 = vpop.f32.mrb[0].mxu0
  %197 = vmatprep.mubr.f32.mxu0 0.0
  %198 = vmatmul.mubr.f32.gmra.mrb[0].mxu0 %v92
  %v199 = vpop.f32.mrb[0].mxu0
  %v200 = vadd.f32 %v65, %v199
  %v201 = vpop.f32.mrb[0].mxu0
  %202 = vmatprep.mubr.f32.mxu0 0.0
  %203 = vmatmul.mubr.f32.gmra.mrb[0].mxu0 %v95
  %v204 = vpop.f32.mrb[0].mxu0
  %v205 = vadd.f32 %v70, %v204
  %v206 = vpop.f32.mrb[0].mxu0
  %207 = vdwg.mxu0
  %v208 = vmax.f32 %v170, 0.0
  %v209 = vmax.f32 %v175, 0.0
  %v210 = vmax.f32 %v180, 0.0
  %v211 = vmax.f32 %v185, 0.0
  %v212 = vmax.f32 %v190, 0.0
  %v213 = vmax.f32 %v195, 0.0
  %v214 = vmax.f32 %v200, 0.0
  %v215 = vmax.f32 %v205, 0.0
  %vm216 = vcmask 130048
  %217 = vst.msk [vmem:[%s3] sm:$0xff] %vm216, %v208
  %218 = vst.msk [vmem:[%s3 + $0x8] sm:$0xff] %vm216, %v209
  %219 = vst.msk [vmem:[%s3 + $0x10] sm:$0xff] %vm216, %v210
  %220 = vst.msk [vmem:[%s3 + $0x18] sm:$0xff] %vm216, %v211
  %221 = vst.msk [vmem:[%s3 + $0x20] sm:$0xff] %vm216, %v212
  %222 = vst.msk [vmem:[%s3 + $0x28] sm:$0xff] %vm216, %v213
  %223 = vst.msk [vmem:[%s3 + $0x30] sm:$0xff] %vm216, %v214
  %224 = vst.msk [vmem:[%s3 + $0x38] sm:$0xff] %vm216, %v215
  %s225 = scalar_lea.vmem %s0, 16
  %v226 = vld [vmem:[%s225] sm:$0xff]
  %v227 = vld [vmem:[%s225 + $0x8] sm:$0xff]
  %v229 = vsel %vm72, %v226, 0
  %v232 = vsel %vm72, %v227, 0
  %234 = vmatprep.subr.mxu0 0.0
  %235 = vmatpush1.xpose.msra.mxu0 %v229
  %236 = vmatprep.subr.mxu0 0.0
  %237 = vmatpush1.xpose.msra.mxu0 %v232
  %238 = vmatprep.subr.mxu0 0.0
  %239 = vmatpush1.xpose.msra.mxu0 0.0
  %240 = vmatprep.subr.mxu0 0.0
  %241 = vmatpush1.xpose.msra.mxu0 0.0
  %242 = vmatprep.subr.mxu0 0.0
  %243 = vmatpush1.xpose.msra.mxu0 0.0
  %244 = vmatprep.subr.mxu0 0.0
  %245 = vmatpush1.xpose.msra.mxu0 0.0
  %246 = vmatprep.subr.mxu0 0.0
  %247 = vmatpush1.xpose.msra.mxu0 0.0
  %248 = vmatprep.subr.mxu0 0.0
  %249 = vmatpush1.xpose.msra.mxu0 0.0
  %250 = vmatprep.subr.mxu0 0.0
  %251 = vmatpush1.xpose.msra.mxu0 0.0
  %252 = vmatprep.subr.mxu0 0.0
  %253 = vmatpush1.xpose.msra.mxu0 0.0
  %254 = vmatprep.subr.mxu0 0.0
  %255 = vmatpush1.xpose.msra.mxu0 0.0
  %256 = vmatprep.subr.mxu0 0.0
  %257 = vmatpush1.xpose.msra.mxu0 0.0
  %258 = vmatprep.subr.mxu0 0.0
  %259 = vmatpush1.xpose.msra.mxu0 0.0
  %260 = vmatprep.subr.mxu0 0.0
  %261 = vmatpush1.xpose.msra.mxu0 0.0
  %262 = vmatprep.subr.mxu0 0.0
  %263 = vmatpush1.xpose.msra.mxu0 0.0
  %264 = vmatprep.subr.mxu0 0.0
  %265 = vmatpush1.xpose.msra.mxu0 0.0
  %266 = vmatprep.subr.mxu0 0.0
  %267 = vmatpush1.xpose.msra.mxu0 0.0
  %268 = vmatprep.subr.mxu0 0.0
  %269 = vmatpush1.xpose.msra.mxu0 0.0
  %270 = vmatprep.subr.mxu0 0.0
  %271 = vmatpush1.xpose.msra.mxu0 0.0
  %272 = vmatprep.subr.mxu0 0.0
  %273 = vmatpush1.xpose.msra.mxu0 0.0
  %274 = vmatprep.subr.mxu0 0.0
  %275 = vmatpush1.xpose.msra.mxu0 0.0
  %276 = vmatprep.subr.mxu0 0.0
  %277 = vmatpush1.xpose.msra.mxu0 0.0
  %278 = vmatprep.subr.mxu0 0.0
  %279 = vmatpush1.xpose.msra.mxu0 0.0
  %280 = vmatprep.subr.mxu0 0.0
  %281 = vmatpush1.xpose.msra.mxu0 0.0
  %282 = vmatprep.subr.mxu0 0.0
  %283 = vmatpush1.xpose.msra.mxu0 0.0
  %284 = vmatprep.subr.mxu0 0.0
  %285 = vmatpush1.xpose.msra.mxu0 0.0
  %286 = vmatprep.subr.mxu0 0.0
  %287 = vmatpush1.xpose.msra.mxu0 0.0
  %288 = vmatprep.subr.mxu0 0.0
  %289 = vmatpush1.xpose.msra.mxu0 0.0
  %290 = vmatprep.subr.mxu0 0.0
  %291 = vmatpush1.xpose.msra.mxu0 0.0
  %292 = vmatprep.subr.mxu0 0.0
  %293 = vmatpush1.xpose.msra.mxu0 0.0
  %294 = vmatprep.subr.mxu0 0.0
  %295 = vmatpush1.xpose.msra.mxu0 0.0
  %296 = vmatprep.subr.mxu0 0.0
  %297 = vmatpush1.xpose.msra.mxu0 0.0
  %298 = vmatprep.mubr.f32.mxu0 0.0
  %299 = vmatmul.mubr.f32.gmra.mrb[0].mxu0 %v74
  %v300 = vpop.f32.mrb[0].mxu0
  %v301 = vadd.f32 %v35, %v300
  %v302 = vpop.f32.mrb[0].mxu0
  %303 = vmatprep.mubr.f32.mxu0 0.0
  %304 = vmatmul.mubr.f32.gmra.mrb[0].mxu0 %v77
  %v305 = vpop.f32.mrb[0].mxu0
  %v306 = vadd.f32 %v40, %v305
  %v307 = vpop.f32.mrb[0].mxu0
  %308 = vmatprep.mubr.f32.mxu0 0.0
  %309 = vmatmul.mubr.f32.gmra.mrb[0].mxu0 %v80
  %v310 = vpop.f32.mrb[0].mxu0
  %v311 = vadd.f32 %v45, %v310
  %v312 = vpop.f32.mrb[0].mxu0
  %313 = vmatprep.mubr.f32.mxu0 0.0
  %314 = vmatmul.mubr.f32.gmra.mrb[0].mxu0 %v83
  %v315 = vpop.f32.mrb[0].mxu0
  %v316 = vadd.f32 %v50, %v315
  %v317 = vpop.f32.mrb[0].mxu0
  %318 = vmatprep.mubr.f32.mxu0 0.0
  %319 = vmatmul.mubr.f32.gmra.mrb[0].mxu0 %v86
  %v320 = vpop.f32.mrb[0].mxu0
  %v321 = vadd.f32 %v55, %v320
  %v322 = vpop.f32.mrb[0].mxu0
  %323 = vmatprep.mubr.f32.mxu0 0.0
  %324 = vmatmul.mubr.f32.gmra.mrb[0].mxu0 %v89
  %v325 = vpop.f32.mrb[0].mxu0
  %v326 = vadd.f32 %v60, %v325
  %v327 = vpop.f32.mrb[0].mxu0
  %328 = vmatprep.mubr.f32.mxu0 0.0
  %329 = vmatmul.mubr.f32.gmra.mrb[0].mxu0 %v92
  %v330 = vpop.f32.mrb[0].mxu0
  %v331 = vadd.f32 %v65, %v330
  %v332 = vpop.f32.mrb[0].mxu0
  %333 = vmatprep.mubr.f32.mxu0 0.0
  %334 = vmatmul.mubr.f32.gmra.mrb[0].mxu0 %v95
  %v335 = vpop.f32.mrb[0].mxu0
  %v336 = vadd.f32 %v70, %v335
  %v337 = vpop.f32.mrb[0].mxu0
  %338 = vdwg.mxu0
  %v339 = vmax.f32 %v301, 0.0
  %v340 = vmax.f32 %v306, 0.0
  %v341 = vmax.f32 %v311, 0.0
  %v342 = vmax.f32 %v316, 0.0
  %v343 = vmax.f32 %v321, 0.0
  %v344 = vmax.f32 %v326, 0.0
  %v345 = vmax.f32 %v331, 0.0
  %v346 = vmax.f32 %v336, 0.0
  %s347 = scalar_lea.vmem %s3, 64
  %348 = vst.msk [vmem:[%s347] sm:$0xff] %vm216, %v339
  %349 = vst.msk [vmem:[%s347 + $0x8] sm:$0xff] %vm216, %v340
  %350 = vst.msk [vmem:[%s347 + $0x10] sm:$0xff] %vm216, %v341
  %351 = vst.msk [vmem:[%s347 + $0x18] sm:$0xff] %vm216, %v342
  %352 = vst.msk [vmem:[%s347 + $0x20] sm:$0xff] %vm216, %v343
  %353 = vst.msk [vmem:[%s347 + $0x28] sm:$0xff] %vm216, %v344
  %354 = vst.msk [vmem:[%s347 + $0x30] sm:$0xff] %vm216, %v345
  %355 = vst.msk [vmem:[%s347 + $0x38] sm:$0xff] %vm216, %v346
  // Predicated region
  $region14: #{tpu_custom_call.1} parent=0 // pred_check
    _
  $region15: #{tpu_custom_call.1} parent=0 // pred_check_branch
    %357 = sbr.rel (0) target = $region17
  $region16: #{tpu_custom_call.1} parent=0 // pred_region
    _
  $region17: #{tpu_custom_call.1} parent=0 // pred_fallthru
    _
  // Predicated region
  $region18: #{tpu_custom_call.1} parent=0 // pred_check
    _
  $region19: #{tpu_custom_call.1} parent=0 // pred_check_branch
    %359 = sbr.rel (0) target = $region21
  $region20: #{tpu_custom_call.1} parent=0 // pred_region
    _
  $region21: #{tpu_custom_call.1} parent=0 // pred_fallthru
    _

</llo_original>
